<compile_context>
chip_gen: v6e
topology: v6e:2x2x1
jax: 0.10.0
libtpu: 0.0.40
codegen_flags: <defaults>
</compile_context>

<pallas_src>
import functools

import jax
import jax.numpy as jnp
from jax.experimental import pallas as pl
from jax.experimental.pallas import tpu as pltpu

EPS = 1e-5


# -----------------------------------------------------------------------------
# Pallas kernel: 3x3 reflect-pad conv + InstanceNorm2d (+ ReLU)
# one (image, C_out tile) per grid step
# -----------------------------------------------------------------------------
def _conv_in_kernel(x_ref, w_ref, mask_ref, o_ref, *, wp, w_out, inv_hw,
                    add_activation):
    # x_ref:    (1, C_in, Lp)   reflect-padded activation, flat spatial, compute dtype
    # w_ref:    (TCO, 9*C_in)   stacked conv weights (K index = tap*C_in + c_in)
    # mask_ref: (1, Lp)         1.0 on valid output columns, 0.0 elsewhere (f32)
    # o_ref:    (1, TCO, H, W)  conv -> InstanceNorm -> (ReLU)
    x = x_ref[0]                                   # (C_in, Lp)
    lp = x.shape[-1]

    # Stack the 9 taps along the contraction (sublane) axis.  Tap (dy, dx)
    # needs the activation shifted left by s = dy*Wp + dx along the flat
    # (row-major, padded-width) spatial axis; pltpu.roll(x, Lp - s) == left
    # shift by s (wrapped lanes only ever land in masked / cropped columns).
    taps = []
    for dy in range(3):
        for dx in range(3):
            s = dy * wp + dx
            taps.append(x if s == 0 else pltpu.roll(x, shift=lp - s, axis=1))
    xs = jnp.concatenate(taps, axis=0)             # (9*C_in, Lp)

    # One deep-K MXU matmul, f32 accumulation.
    acc = jnp.dot(w_ref[...], xs, preferred_element_type=jnp.float32)  # (TCO, Lp)

    # InstanceNorm2d (no affine): single-pass masked statistics over H*W.
    # Mask once; invalid columns are zeroed and later cropped, so the masked
    # accumulator feeds the stats AND the normalized store.
    acc = acc * mask_ref[...]
    mean = jnp.sum(acc, axis=1, keepdims=True) * inv_hw
    var = jnp.sum(acc * acc, axis=1, keepdims=True) * inv_hw - mean * mean
    var = jnp.maximum(var, 0.0)                    # guard f32 cancellation
    y = (acc - mean) * jax.lax.rsqrt(var + EPS)
    if add_activation:
        y = jnp.maximum(y, 0.0)
    y = y.astype(o_ref.dtype)

    # Crop padded-width garbage columns and store (H, W) directly: static
    # per-row slices, so no post-kernel de-padding pass is needed in XLA.
    # TODO(synk): for very large H, add a row-tile grid axis instead of
    # unrolling H stores.
    h_out = o_ref.shape[2]
    for h in range(h_out):
        o_ref[0, :, h, :] = y[:, h * wp:h * wp + w_out]


# -----------------------------------------------------------------------------
# Wrapper
# -----------------------------------------------------------------------------
def _pick_cout_tile(c_out, h, w, lp, out_itemsize, budget_bytes=16 << 20):
    """Largest C_out tile whose output block + f32 temporaries fit the budget."""
    per_ch = 2 * h * w * out_itemsize + 4 * lp * 4
    cap = max(1, budget_bytes // max(per_ch, 1))
    if c_out <= cap:
        return c_out
    best = None
    for d in range(1, c_out + 1):
        # keep weight-block sublane dim a multiple of 8 when tiling
        if c_out % d == 0 and d % 8 == 0 and d <= cap:
            best = d
    return best if best is not None else c_out


@functools.partial(jax.jit, static_argnames=("add_activation", "compute_dtype",
                                              "out_dtype"))
def convolutional_block(x, w, b=None, *, add_activation=True,
                        compute_dtype=jnp.bfloat16, out_dtype=jnp.float32):
    """Conv2d(3x3, stride 1, pad 1, reflect) -> InstanceNorm2d -> [ReLU].

    Matches ConvolutionalBlock(in_c, out_c, is_downsampling=True,
    add_activation=..., kernel_size=3, padding=1).  The conv bias `b` is
    accepted for interface parity but unused: InstanceNorm (no affine)
    subtracts the per-channel mean, which cancels the bias exactly.
    """
    # TODO(synk): ConvTranspose2d path (is_downsampling=False), strides != 1
    # and kernel sizes != 3 are not implemented in this kernel.
    del b
    N, C_in, H, W = x.shape
    C_out = w.shape[0]
    Hp, Wp = H + 2, W + 2
    # Lane-aligned flat padded length.  No extra slack needed: the largest tap
    # read for any valid output column is (H+1)*Wp + W + 1 < Hp*Wp.
    Lp = ((Hp * Wp + 127) // 128) * 128

    # Reflect pad + flatten spatial + single cast (pure data movement in XLA).
    xp = jnp.pad(x, ((0, 0), (0, 0), (1, 1), (1, 1)), mode="reflect")
    xf = xp.reshape(N, C_in, Hp * Wp)
    xf = jnp.pad(xf, ((0, 0), (0, 0), (0, Lp - Hp * Wp)))
    xf = xf.astype(compute_dtype)

    # (C_out, C_in, 3, 3) -> (C_out, 9*C_in); K index = (dy*3+dx)*C_in + c_in,
    # matching the tap stacking order inside the kernel.
    wt = jnp.transpose(w, (0, 2, 3, 1)).reshape(C_out, 9 * C_in)
    wt = wt.astype(compute_dtype)

    # Valid-output mask over the flat padded-width spatial axis.
    idx = jnp.arange(Lp)
    mask = (((idx % Wp) < W) & (idx < H * Wp)).astype(jnp.float32).reshape(1, Lp)

    out_itm = jnp.dtype(out_dtype).itemsize
    in_itm = jnp.dtype(compute_dtype).itemsize
    tco = _pick_cout_tile(C_out, H, W, Lp, out_itm)
    n_ct = C_out // tco

    # Scoped-VMEM ceiling clamped to the chip's physical VMEM (v7x: 64 MiB).
    need = (2 * (C_in * Lp * in_itm            # x block (double-buffered)
                 + tco * 9 * C_in * in_itm     # weight block
                 + Lp * 4                      # mask
                 + tco * H * W * out_itm)      # output block
            + 9 * C_in * Lp * in_itm           # stacked tap operand
            + 4 * tco * Lp * 4)                # acc + normalize temporaries
    try:
        vmem_cap = int(pltpu.get_tpu_info().vmem_capacity_bytes)
    except Exception:                          # conservative fallback
        vmem_cap = 64 * 1024 * 1024
    vmem_limit = int(min(max(need + (8 << 20), 32 << 20), int(vmem_cap * 0.8)))

    kernel = functools.partial(
        _conv_in_kernel, wp=Wp, w_out=W, inv_hw=1.0 / float(H * W),
        add_activation=add_activation)

    out = pl.pallas_call(
        kernel,
        out_shape=jax.ShapeDtypeStruct((N, C_out, H, W), out_dtype),
        grid=(N, n_ct),
        in_specs=[
            pl.BlockSpec((1, C_in, Lp), lambda n, c: (n, 0, 0)),   # resident in c
            pl.BlockSpec((tco, 9 * C_in), lambda n, c: (c, 0)),
            pl.BlockSpec((1, Lp), lambda n, c: (0, 0)),
        ],
        out_specs=pl.BlockSpec((1, tco, H, W), lambda n, c: (n, c, 0, 0)),
        compiler_params=pltpu.CompilerParams(
            dimension_semantics=("parallel", "parallel"),
            vmem_limit_bytes=vmem_limit),
    )(xf, wt, mask)

    return out


# -----------------------------------------------------------------------------
# Pure-JAX reference (for correctness checking)
# -----------------------------------------------------------------------------
def _reference(x, w, b, add_activation=True):
    xp = jnp.pad(x, ((0, 0), (0, 0), (1, 1), (1, 1)), mode="reflect")
    z = jax.lax.conv_general_dilated(
        xp, w, (1, 1), "VALID", dimension_numbers=("NCHW", "OIHW", "NCHW"))
    z = z + b[None, :, None, None]
    mean = z.mean(axis=(2, 3), keepdims=True)
    var = ((z - mean) ** 2).mean(axis=(2, 3), keepdims=True)
    z = (z - mean) * jax.lax.rsqrt(var + EPS)
    return jnp.maximum(z, 0.0) if add_activation else z


# -----------------------------------------------------------------------------
if __name__ == "__main__":
    N, C, H, W = 2, 4, 16, 16

    key = jax.random.PRNGKey(0)
    kx, kw, kb = jax.random.split(key, 3)
    x = jax.random.normal(kx, (N, C, H, W), jnp.float32)
    w = jax.random.normal(kw, (C, C, 3, 3), jnp.float32) * 0.1
    b = jax.random.normal(kb, (C,), jnp.float32) * 0.1

    ref = jax.block_until_ready(_reference(x, w, b, add_activation=True))
    ref_noact = jax.block_until_ready(_reference(x, w, b, add_activation=False))

    # Exact path (f32 MXU operands): must match tightly.
    out_f32 = jax.block_until_ready(
        convolutional_block(x, w, b, add_activation=True,
                            compute_dtype=jnp.float32))
    assert out_f32.shape == (N, C, H, W)
    assert jnp.allclose(out_f32, ref, rtol=1e-4, atol=1e-4), (
        "f32 path mismatch: max abs err = %e"
        % float(jnp.max(jnp.abs(out_f32 - ref))))

    # add_activation=False variant (f32 path).
    out_noact = jax.block_until_ready(
        convolutional_block(x, w, b, add_activation=False,
                            compute_dtype=jnp.float32))
    assert jnp.allclose(out_noact, ref_noact, rtol=1e-4, atol=1e-4), (
        "no-activation mismatch: max abs err = %e"
        % float(jnp.max(jnp.abs(out_noact - ref_noact))))

    # Default fast path (bf16 MXU operands, f32 accumulation).  bf16
    # quantization of x and w before InstanceNorm justifies the 2e-2 tolerance.
    out_bf16 = jax.block_until_ready(convolutional_block(x, w, b))
    assert jnp.allclose(out_bf16, ref, rtol=2e-2, atol=2e-2), (
        "bf16 path mismatch: max abs err = %e"
        % float(jnp.max(jnp.abs(out_bf16 - ref))))

    print("KERNEL_OK")
</pallas_src>

<mosaic_0001>
module attributes {stable_mosaic.version = 11 : i64} {
  func.func @_conv_in_kernel(%arg0: i32, %arg1: i32, %arg2: memref<1x4x384xf32, #tpu.memory_space<vmem>>, %arg3: memref<4x36xf32, #tpu.memory_space<vmem>>, %arg4: memref<1x384xf32, #tpu.memory_space<vmem>>, %arg5: memref<1x4x16x16xf32, #tpu.memory_space<vmem>>) attributes {dimension_semantics = [#tpu.dimension_semantics<parallel>, #tpu.dimension_semantics<parallel>], iteration_bounds = array<i64: 2, 1>, scalar_prefetch = 0 : i64, scratch_operands = 0 : i64, tpu.core_type = #tpu.core_type<tc>, window_params = [{transform_indices = @transform_0, window_bounds = array<i64: 1, 4, 384>}, {transform_indices = @transform_1, window_bounds = array<i64: 4, 36>}, {pipeline_mode = #tpu.pipeline_mode<synchronous>, transform_indices = @transform_2, window_bounds = array<i64: 1, 384>}, {transform_indices = @transform_3, window_bounds = array<i64: 1, 4, 16, 16>}]} {
    %c0 = arith.constant 0 : index
    %c0_0 = arith.constant 0 : index
    %c0_1 = arith.constant 0 : index
    %0 = vector.load %arg2[%c0, %c0_0, %c0_1] : memref<1x4x384xf32, #tpu.memory_space<vmem>>, vector<1x4x384xf32>
    %1 = vector.shape_cast %0 : vector<1x4x384xf32> to vector<4x384xf32>
    %c383_i32 = arith.constant 383 : i32
    %2 = tpu.dynamic_rotate %1 by %c383_i32 dim 1 : vector<4x384xf32>, i32 -> vector<4x384xf32>
    %c382_i32 = arith.constant 382 : i32
    %3 = tpu.dynamic_rotate %1 by %c382_i32 dim 1 : vector<4x384xf32>, i32 -> vector<4x384xf32>
    %c366_i32 = arith.constant 366 : i32
    %4 = tpu.dynamic_rotate %1 by %c366_i32 dim 1 : vector<4x384xf32>, i32 -> vector<4x384xf32>
    %c365_i32 = arith.constant 365 : i32
    %5 = tpu.dynamic_rotate %1 by %c365_i32 dim 1 : vector<4x384xf32>, i32 -> vector<4x384xf32>
    %c364_i32 = arith.constant 364 : i32
    %6 = tpu.dynamic_rotate %1 by %c364_i32 dim 1 : vector<4x384xf32>, i32 -> vector<4x384xf32>
    %c348_i32 = arith.constant 348 : i32
    %7 = tpu.dynamic_rotate %1 by %c348_i32 dim 1 : vector<4x384xf32>, i32 -> vector<4x384xf32>
    %c347_i32 = arith.constant 347 : i32
    %8 = tpu.dynamic_rotate %1 by %c347_i32 dim 1 : vector<4x384xf32>, i32 -> vector<4x384xf32>
    %c346_i32 = arith.constant 346 : i32
    %9 = tpu.dynamic_rotate %1 by %c346_i32 dim 1 : vector<4x384xf32>, i32 -> vector<4x384xf32>
    %10 = tpu.concatenate %1, %2, %3, %4, %5, %6, %7, %8, %9 in 0 : vector<4x384xf32>, vector<4x384xf32>, vector<4x384xf32>, vector<4x384xf32>, vector<4x384xf32>, vector<4x384xf32>, vector<4x384xf32>, vector<4x384xf32>, vector<4x384xf32> -> vector<36x384xf32>
    %c0_2 = arith.constant 0 : index
    %c0_3 = arith.constant 0 : index
    %11 = vector.load %arg3[%c0_2, %c0_3] : memref<4x36xf32, #tpu.memory_space<vmem>>, vector<4x36xf32>
    %cst = arith.constant dense<0.000000e+00> : vector<4x384xf32>
    %12 = tpu.matmul %11, %10, %cst {dimension_numbers = #tpu.dot_dimension_numbers<[1], [0], [0], [1], [0, 0, 1, 1], [], []>} : vector<4x36xf32>, vector<36x384xf32>, vector<4x384xf32> -> vector<4x384xf32>
    %c0_4 = arith.constant 0 : index
    %c0_5 = arith.constant 0 : index
    %13 = vector.load %arg4[%c0_4, %c0_5] : memref<1x384xf32, #tpu.memory_space<vmem>>, vector<1x384xf32>
    %14 = vector.broadcast %13 : vector<1x384xf32> to vector<4x384xf32>
    %15 = arith.mulf %12, %14 : vector<4x384xf32>
    %cst_6 = arith.constant dense<0.000000e+00> : vector<4xf32>
    %16 = vector.multi_reduction <add>, %15, %cst_6 [1] : vector<4x384xf32> to vector<4xf32>
    %17 = vector.shape_cast %16 : vector<4xf32> to vector<4x1xf32>
    %cst_7 = arith.constant 3.906250e-03 : f32
    %18 = vector.broadcast %cst_7 : f32 to vector<4x1xf32>
    %19 = arith.mulf %17, %18 : vector<4x1xf32>
    %20 = arith.mulf %15, %15 : vector<4x384xf32>
    %cst_8 = arith.constant dense<0.000000e+00> : vector<4xf32>
    %21 = vector.multi_reduction <add>, %20, %cst_8 [1] : vector<4x384xf32> to vector<4xf32>
    %22 = vector.shape_cast %21 : vector<4xf32> to vector<4x1xf32>
    %cst_9 = arith.constant 3.906250e-03 : f32
    %23 = vector.broadcast %cst_9 : f32 to vector<4x1xf32>
    %24 = arith.mulf %22, %23 : vector<4x1xf32>
    %25 = arith.mulf %19, %19 : vector<4x1xf32>
    %26 = arith.subf %24, %25 : vector<4x1xf32>
    %cst_10 = arith.constant 0.000000e+00 : f32
    %27 = vector.broadcast %cst_10 : f32 to vector<4x1xf32>
    %28 = arith.maximumf %26, %27 : vector<4x1xf32>
    %29 = vector.broadcast %19 : vector<4x1xf32> to vector<4x384xf32>
    %30 = arith.subf %15, %29 : vector<4x384xf32>
    %cst_11 = arith.constant 9.99999974E-6 : f32
    %31 = vector.broadcast %cst_11 : f32 to vector<4x1xf32>
    %32 = arith.addf %28, %31 : vector<4x1xf32>
    %33 = math.rsqrt %32 : vector<4x1xf32>
    %34 = vector.broadcast %33 : vector<4x1xf32> to vector<4x384xf32>
    %35 = arith.mulf %30, %34 : vector<4x384xf32>
    %cst_12 = arith.constant 0.000000e+00 : f32
    %36 = vector.broadcast %cst_12 : f32 to vector<4x384xf32>
    %37 = arith.maximumf %35, %36 : vector<4x384xf32>
    %38 = vector.extract_strided_slice %37 {offsets = [0, 0], sizes = [4, 16], strides = [1, 1]} : vector<4x384xf32> to vector<4x16xf32>
    %c0_13 = arith.constant 0 : index
    %c0_14 = arith.constant 0 : index
    %c0_15 = arith.constant 0 : index
    %c0_16 = arith.constant 0 : index
    %39 = vector.load %arg5[%c0_13, %c0_14, %c0_15, %c0_16] : memref<1x4x16x16xf32, #tpu.memory_space<vmem>>, vector<1x4x1x16xf32>
    %40 = vector.shape_cast %39 : vector<1x4x1x16xf32> to vector<4x16xf32>
    %41 = vector.shape_cast %38 : vector<4x16xf32> to vector<1x4x1x16xf32>
    tpu.vector_store %arg5[%c0_13, %c0_14, %c0_15, %c0_16], %41 {strides = array<i32>} : memref<1x4x16x16xf32, #tpu.memory_space<vmem>>, vector<1x4x1x16xf32>,
    %42 = vector.extract_strided_slice %37 {offsets = [0, 18], sizes = [4, 16], strides = [1, 1]} : vector<4x384xf32> to vector<4x16xf32>
    %c0_17 = arith.constant 0 : index
    %c0_18 = arith.constant 0 : index
    %c1 = arith.constant 1 : index
    %c0_19 = arith.constant 0 : index
    %43 = vector.load %arg5[%c0_17, %c0_18, %c1, %c0_19] : memref<1x4x16x16xf32, #tpu.memory_space<vmem>>, vector<1x4x1x16xf32>
    %44 = vector.shape_cast %43 : vector<1x4x1x16xf32> to vector<4x16xf32>
    %45 = vector.shape_cast %42 : vector<4x16xf32> to vector<1x4x1x16xf32>
    tpu.vector_store %arg5[%c0_17, %c0_18, %c1, %c0_19], %45 {strides = array<i32>} : memref<1x4x16x16xf32, #tpu.memory_space<vmem>>, vector<1x4x1x16xf32>,
    %46 = vector.extract_strided_slice %37 {offsets = [0, 36], sizes = [4, 16], strides = [1, 1]} : vector<4x384xf32> to vector<4x16xf32>
    %c0_20 = arith.constant 0 : index
    %c0_21 = arith.constant 0 : index
    %c2 = arith.constant 2 : index
    %c0_22 = arith.constant 0 : index
    %47 = vector.load %arg5[%c0_20, %c0_21, %c2, %c0_22] : memref<1x4x16x16xf32, #tpu.memory_space<vmem>>, vector<1x4x1x16xf32>
    %48 = vector.shape_cast %47 : vector<1x4x1x16xf32> to vector<4x16xf32>
    %49 = vector.shape_cast %46 : vector<4x16xf32> to vector<1x4x1x16xf32>
    tpu.vector_store %arg5[%c0_20, %c0_21, %c2, %c0_22], %49 {strides = array<i32>} : memref<1x4x16x16xf32, #tpu.memory_space<vmem>>, vector<1x4x1x16xf32>,
    %50 = vector.extract_strided_slice %37 {offsets = [0, 54], sizes = [4, 16], strides = [1, 1]} : vector<4x384xf32> to vector<4x16xf32>
    %c0_23 = arith.constant 0 : index
    %c0_24 = arith.constant 0 : index
    %c3 = arith.constant 3 : index
    %c0_25 = arith.constant 0 : index
    %51 = vector.load %arg5[%c0_23, %c0_24, %c3, %c0_25] : memref<1x4x16x16xf32, #tpu.memory_space<vmem>>, vector<1x4x1x16xf32>
    %52 = vector.shape_cast %51 : vector<1x4x1x16xf32> to vector<4x16xf32>
    %53 = vector.shape_cast %50 : vector<4x16xf32> to vector<1x4x1x16xf32>
    tpu.vector_store %arg5[%c0_23, %c0_24, %c3, %c0_25], %53 {strides = array<i32>} : memref<1x4x16x16xf32, #tpu.memory_space<vmem>>, vector<1x4x1x16xf32>,
    %54 = vector.extract_strided_slice %37 {offsets = [0, 72], sizes = [4, 16], strides = [1, 1]} : vector<4x384xf32> to vector<4x16xf32>
    %c0_26 = arith.constant 0 : index
    %c0_27 = arith.constant 0 : index
    %c4 = arith.constant 4 : index
    %c0_28 = arith.constant 0 : index
    %55 = vector.load %arg5[%c0_26, %c0_27, %c4, %c0_28] : memref<1x4x16x16xf32, #tpu.memory_space<vmem>>, vector<1x4x1x16xf32>
    %56 = vector.shape_cast %55 : vector<1x4x1x16xf32> to vector<4x16xf32>
    %57 = vector.shape_cast %54 : vector<4x16xf32> to vector<1x4x1x16xf32>
    tpu.vector_store %arg5[%c0_26, %c0_27, %c4, %c0_28], %57 {strides = array<i32>} : memref<1x4x16x16xf32, #tpu.memory_space<vmem>>, vector<1x4x1x16xf32>,
    %58 = vector.extract_strided_slice %37 {offsets = [0, 90], sizes = [4, 16], strides = [1, 1]} : vector<4x384xf32> to vector<4x16xf32>
    %c0_29 = arith.constant 0 : index
    %c0_30 = arith.constant 0 : index
    %c5 = arith.constant 5 : index
    %c0_31 = arith.constant 0 : index
    %59 = vector.load %arg5[%c0_29, %c0_30, %c5, %c0_31] : memref<1x4x16x16xf32, #tpu.memory_space<vmem>>, vector<1x4x1x16xf32>
    %60 = vector.shape_cast %59 : vector<1x4x1x16xf32> to vector<4x16xf32>
    %61 = vector.shape_cast %58 : vector<4x16xf32> to vector<1x4x1x16xf32>
    tpu.vector_store %arg5[%c0_29, %c0_30, %c5, %c0_31], %61 {strides = array<i32>} : memref<1x4x16x16xf32, #tpu.memory_space<vmem>>, vector<1x4x1x16xf32>,
    %62 = vector.extract_strided_slice %37 {offsets = [0, 108], sizes = [4, 16], strides = [1, 1]} : vector<4x384xf32> to vector<4x16xf32>
    %c0_32 = arith.constant 0 : index
    %c0_33 = arith.constant 0 : index
    %c6 = arith.constant 6 : index
    %c0_34 = arith.constant 0 : index
    %63 = vector.load %arg5[%c0_32, %c0_33, %c6, %c0_34] : memref<1x4x16x16xf32, #tpu.memory_space<vmem>>, vector<1x4x1x16xf32>
    %64 = vector.shape_cast %63 : vector<1x4x1x16xf32> to vector<4x16xf32>
    %65 = vector.shape_cast %62 : vector<4x16xf32> to vector<1x4x1x16xf32>
    tpu.vector_store %arg5[%c0_32, %c0_33, %c6, %c0_34], %65 {strides = array<i32>} : memref<1x4x16x16xf32, #tpu.memory_space<vmem>>, vector<1x4x1x16xf32>,
    %66 = vector.extract_strided_slice %37 {offsets = [0, 126], sizes = [4, 16], strides = [1, 1]} : vector<4x384xf32> to vector<4x16xf32>
    %c0_35 = arith.constant 0 : index
    %c0_36 = arith.constant 0 : index
    %c7 = arith.constant 7 : index
    %c0_37 = arith.constant 0 : index
    %67 = vector.load %arg5[%c0_35, %c0_36, %c7, %c0_37] : memref<1x4x16x16xf32, #tpu.memory_space<vmem>>, vector<1x4x1x16xf32>
    %68 = vector.shape_cast %67 : vector<1x4x1x16xf32> to vector<4x16xf32>
    %69 = vector.shape_cast %66 : vector<4x16xf32> to vector<1x4x1x16xf32>
    tpu.vector_store %arg5[%c0_35, %c0_36, %c7, %c0_37], %69 {strides = array<i32>} : memref<1x4x16x16xf32, #tpu.memory_space<vmem>>, vector<1x4x1x16xf32>,
    %70 = vector.extract_strided_slice %37 {offsets = [0, 144], sizes = [4, 16], strides = [1, 1]} : vector<4x384xf32> to vector<4x16xf32>
    %c0_38 = arith.constant 0 : index
    %c0_39 = arith.constant 0 : index
    %c8 = arith.constant 8 : index
    %c0_40 = arith.constant 0 : index
    %71 = vector.load %arg5[%c0_38, %c0_39, %c8, %c0_40] : memref<1x4x16x16xf32, #tpu.memory_space<vmem>>, vector<1x4x1x16xf32>
    %72 = vector.shape_cast %71 : vector<1x4x1x16xf32> to vector<4x16xf32>
    %73 = vector.shape_cast %70 : vector<4x16xf32> to vector<1x4x1x16xf32>
    tpu.vector_store %arg5[%c0_38, %c0_39, %c8, %c0_40], %73 {strides = array<i32>} : memref<1x4x16x16xf32, #tpu.memory_space<vmem>>, vector<1x4x1x16xf32>,
    %74 = vector.extract_strided_slice %37 {offsets = [0, 162], sizes = [4, 16], strides = [1, 1]} : vector<4x384xf32> to vector<4x16xf32>
    %c0_41 = arith.constant 0 : index
    %c0_42 = arith.constant 0 : index
    %c9 = arith.constant 9 : index
    %c0_43 = arith.constant 0 : index
    %75 = vector.load %arg5[%c0_41, %c0_42, %c9, %c0_43] : memref<1x4x16x16xf32, #tpu.memory_space<vmem>>, vector<1x4x1x16xf32>
    %76 = vector.shape_cast %75 : vector<1x4x1x16xf32> to vector<4x16xf32>
    %77 = vector.shape_cast %74 : vector<4x16xf32> to vector<1x4x1x16xf32>
    tpu.vector_store %arg5[%c0_41, %c0_42, %c9, %c0_43], %77 {strides = array<i32>} : memref<1x4x16x16xf32, #tpu.memory_space<vmem>>, vector<1x4x1x16xf32>,
    %78 = vector.extract_strided_slice %37 {offsets = [0, 180], sizes = [4, 16], strides = [1, 1]} : vector<4x384xf32> to vector<4x16xf32>
    %c0_44 = arith.constant 0 : index
    %c0_45 = arith.constant 0 : index
    %c10 = arith.constant 10 : index
    %c0_46 = arith.constant 0 : index
    %79 = vector.load %arg5[%c0_44, %c0_45, %c10, %c0_46] : memref<1x4x16x16xf32, #tpu.memory_space<vmem>>, vector<1x4x1x16xf32>
    %80 = vector.shape_cast %79 : vector<1x4x1x16xf32> to vector<4x16xf32>
    %81 = vector.shape_cast %78 : vector<4x16xf32> to vector<1x4x1x16xf32>
    tpu.vector_store %arg5[%c0_44, %c0_45, %c10, %c0_46], %81 {strides = array<i32>} : memref<1x4x16x16xf32, #tpu.memory_space<vmem>>, vector<1x4x1x16xf32>,
    %82 = vector.extract_strided_slice %37 {offsets = [0, 198], sizes = [4, 16], strides = [1, 1]} : vector<4x384xf32> to vector<4x16xf32>
    %c0_47 = arith.constant 0 : index
    %c0_48 = arith.constant 0 : index
    %c11 = arith.constant 11 : index
    %c0_49 = arith.constant 0 : index
    %83 = vector.load %arg5[%c0_47, %c0_48, %c11, %c0_49] : memref<1x4x16x16xf32, #tpu.memory_space<vmem>>, vector<1x4x1x16xf32>
    %84 = vector.shape_cast %83 : vector<1x4x1x16xf32> to vector<4x16xf32>
    %85 = vector.shape_cast %82 : vector<4x16xf32> to vector<1x4x1x16xf32>
    tpu.vector_store %arg5[%c0_47, %c0_48, %c11, %c0_49], %85 {strides = array<i32>} : memref<1x4x16x16xf32, #tpu.memory_space<vmem>>, vector<1x4x1x16xf32>,
    %86 = vector.extract_strided_slice %37 {offsets = [0, 216], sizes = [4, 16], strides = [1, 1]} : vector<4x384xf32> to vector<4x16xf32>
    %c0_50 = arith.constant 0 : index
    %c0_51 = arith.constant 0 : index
    %c12 = arith.constant 12 : index
    %c0_52 = arith.constant 0 : index
    %87 = vector.load %arg5[%c0_50, %c0_51, %c12, %c0_52] : memref<1x4x16x16xf32, #tpu.memory_space<vmem>>, vector<1x4x1x16xf32>
    %88 = vector.shape_cast %87 : vector<1x4x1x16xf32> to vector<4x16xf32>
    %89 = vector.shape_cast %86 : vector<4x16xf32> to vector<1x4x1x16xf32>
    tpu.vector_store %arg5[%c0_50, %c0_51, %c12, %c0_52], %89 {strides = array<i32>} : memref<1x4x16x16xf32, #tpu.memory_space<vmem>>, vector<1x4x1x16xf32>,
    %90 = vector.extract_strided_slice %37 {offsets = [0, 234], sizes = [4, 16], strides = [1, 1]} : vector<4x384xf32> to vector<4x16xf32>
    %c0_53 = arith.constant 0 : index
    %c0_54 = arith.constant 0 : index
    %c13 = arith.constant 13 : index
    %c0_55 = arith.constant 0 : index
    %91 = vector.load %arg5[%c0_53, %c0_54, %c13, %c0_55] : memref<1x4x16x16xf32, #tpu.memory_space<vmem>>, vector<1x4x1x16xf32>
    %92 = vector.shape_cast %91 : vector<1x4x1x16xf32> to vector<4x16xf32>
    %93 = vector.shape_cast %90 : vector<4x16xf32> to vector<1x4x1x16xf32>
    tpu.vector_store %arg5[%c0_53, %c0_54, %c13, %c0_55], %93 {strides = array<i32>} : memref<1x4x16x16xf32, #tpu.memory_space<vmem>>, vector<1x4x1x16xf32>,
    %94 = vector.extract_strided_slice %37 {offsets = [0, 252], sizes = [4, 16], strides = [1, 1]} : vector<4x384xf32> to vector<4x16xf32>
    %c0_56 = arith.constant 0 : index
    %c0_57 = arith.constant 0 : index
    %c14 = arith.constant 14 : index
    %c0_58 = arith.constant 0 : index
    %95 = vector.load %arg5[%c0_56, %c0_57, %c14, %c0_58] : memref<1x4x16x16xf32, #tpu.memory_space<vmem>>, vector<1x4x1x16xf32>
    %96 = vector.shape_cast %95 : vector<1x4x1x16xf32> to vector<4x16xf32>
    %97 = vector.shape_cast %94 : vector<4x16xf32> to vector<1x4x1x16xf32>
    tpu.vector_store %arg5[%c0_56, %c0_57, %c14, %c0_58], %97 {strides = array<i32>} : memref<1x4x16x16xf32, #tpu.memory_space<vmem>>, vector<1x4x1x16xf32>,
    %98 = vector.extract_strided_slice %37 {offsets = [0, 270], sizes = [4, 16], strides = [1, 1]} : vector<4x384xf32> to vector<4x16xf32>
    %c0_59 = arith.constant 0 : index
    %c0_60 = arith.constant 0 : index
    %c15 = arith.constant 15 : index
    %c0_61 = arith.constant 0 : index
    %99 = vector.load %arg5[%c0_59, %c0_60, %c15, %c0_61] : memref<1x4x16x16xf32, #tpu.memory_space<vmem>>, vector<1x4x1x16xf32>
    %100 = vector.shape_cast %99 : vector<1x4x1x16xf32> to vector<4x16xf32>
    %101 = vector.shape_cast %98 : vector<4x16xf32> to vector<1x4x1x16xf32>
    tpu.vector_store %arg5[%c0_59, %c0_60, %c15, %c0_61], %101 {strides = array<i32>} : memref<1x4x16x16xf32, #tpu.memory_space<vmem>>, vector<1x4x1x16xf32>,
    return
  }
  func.func @transform_0(%arg0: i32, %arg1: i32) -> (i32, i32, i32) {
    %c0_i32 = arith.constant 0 : i32
    %c0_i32_0 = arith.constant 0 : i32
    %c0_i32_1 = arith.constant 0 : i32
    return %arg0, %c0_i32, %c0_i32_0 : i32, i32, i32
  }
  func.func @transform_1(%arg0: i32, %arg1: i32) -> (i32, i32) {
    %c0_i32 = arith.constant 0 : i32
    %c0_i32_0 = arith.constant 0 : i32
    return %arg1, %c0_i32 : i32, i32
  }
  func.func @transform_2(%arg0: i32, %arg1: i32) -> (i32, i32) {
    %c0_i32 = arith.constant 0 : i32
    %c0_i32_0 = arith.constant 0 : i32
    %c0_i32_1 = arith.constant 0 : i32
    return %c0_i32, %c0_i32_0 : i32, i32
  }
  func.func @transform_3(%arg0: i32, %arg1: i32) -> (i32, i32, i32, i32) {
    %c0_i32 = arith.constant 0 : i32
    %c0_i32_0 = arith.constant 0 : i32
    %c0_i32_1 = arith.constant 0 : i32
    return %arg0, %arg1, %c0_i32, %c0_i32_0 : i32, i32, i32, i32
  }
}

</mosaic_0001>

<llo_original>
// kernel: convolutional_block.1
$region0: #{convolutional_block.1}
  #allocation0 [shape = 'u32[]', space=smem, size = 0x4, offset = 0x4, fixed_abs, tag = 'smem constant byte address 0x4 - core index']
  #allocation1 [shape = 'u32[144,128]{1,0:T(1,128)}', space=vmem, size = 0x12000, scoped, tag = 'internal scratch']
  %s0 = inlined_call_operand.vmem [shape: f32[2,4,384], index: 0, kind: input, shape index: {}]
  %s1 = inlined_call_operand.vmem [shape: f32[4,36], index: 1, kind: input, shape index: {}]
  %s2 = inlined_call_operand.vmem [shape: f32[1,384], index: 2, kind: input, shape index: {}]
  %s3 = inlined_call_operand.hbm [shape: f32[2,4,16,16], index: 3, kind: output, shape index: {}]
  %s4 = sld [smem:[#allocation0]]
  $region45: #{convolutional_block.1} parent=0
    _
  %s6 = ssub.s32 1, %s4
  %s7 = scalar_select 0, %s6, %s4
  $region1: #{convolutional_block.1} parent=0
    #allocation2 [shape = 'u8[65536]{0}', space=vmem, size = 0x10000, scoped, tag = 'output window, operand 0']
    #allocation3 [shape = 's32[2]{0}', space=sflag, size = 0x8, scoped, tag = 'scoped memory for convolutional_block.1']
    %8 = vsyncpa [#allocation3], 0
    %s9 = scalar_lea.sflag [#allocation3], 1
    %10 = vsyncpa %s9, 0
    loop: start=0, step=1, limit=4
    $region2: #{convolutional_block.1} parent=1 // loop_pre_header
      _
    $region3: #{convolutional_block.1} parent=1 // loop_header
      %s12 = sphi 0, %s16
      %p13 = scmp.ge.s32.totalorder %s12, 4
      %s19 = sphi 0, %s31
      %s20 = sphi 0, %s27
      %s21 = sphi 0, %s19
      %s22 = sphi 0, %s20
      %s23 = sphi 0, %s21
      %s24 = sphi 0, %s22
      %s34 = sphi 0, %s36
      %s37 = sphi 0, %s34
      %s38 = sphi 0, %s37
      %s54 = sphi 0, %s38
      %s60 = sphi 0, %s62
      %s63 = sphi 0, %s60
      %s64 = sphi 0, %s63
      %s80 = sphi 0, %s64
      %s84 = sphi 0, %s84
      %s86 = sphi 0, %s84
      %s87 = sphi 0, %s86
      %s101 = sphi 0, %s87
      %s109 = sphi 0, %s111
      %s112 = sphi 0, %s109
      %s113 = sphi 0, %s112
      %s129 = sphi 0, %s113
    $region4: #{convolutional_block.1} parent=1 // loop_header_branch
      %15 = sbr.rel (%p13) target = $region8
    $region5: #{convolutional_block.1} parent=1 // loop_body
      %s17 = ssub.s32 %s12, 1
      %s18 = ssub.s32 %s12, 2
      %s25 = sadd.s32 1, %s20
      %p26 = scmp.ge.s32.totalorder %s25, 1
      %s27 = scalar_select %p26, 0, %s25
      %s28 = sadd.s32 1, %s19
      %s29 = scalar_select %p26, %s28, %s19
      %p30 = scmp.ge.s32.totalorder %s29, 2
      %s31 = scalar_select %p30, 0, %s29
      %s32 = ssub.s32 %s19, %s31
      %p33 = scmp.eq.s32.totalorder %s32, 0
      %s35 = sadd.s32 %s34, 1
      %s36 = scalar_select %p33, %s34, %s35
      %p39 = pneg %p33
      %p40 = scmp.eq.s32.totalorder %s12, 1
      %p41 = por %p39, %p40
      %p42 = scmp.ne.s32.totalorder %s34, %s37
      %p43 = scmp.eq.s32.totalorder %s12, 0
      %p44 = por %p42, %p43
      %p45 = scmp.ne.s32.totalorder %s34, %s37
      %p46 = scmp.eq.s32.totalorder %s17, 1
      %p47 = por %p45, %p46
      %p48 = scmp.ne.s32.totalorder %s37, %s38
      %p49 = scmp.eq.s32.totalorder %s17, 0
      %p50 = por %p48, %p49
      %p51 = scmp.ne.s32.totalorder %s37, %s38
      %p52 = scmp.eq.s32.totalorder %s18, 1
      %p53 = por %p51, %p52
      %p55 = scmp.ne.s32.totalorder %s38, %s54
      %p56 = scmp.eq.s32.totalorder %s18, 0
      %p57 = por %p55, %p56
      %s58 = ssub.s32 %s20, %s27
      %p59 = scmp.eq.s32.totalorder %s58, 0
      %s61 = sadd.s32 %s60, 1
      %s62 = scalar_select %p59, %s60, %s61
      %p65 = pneg %p59
      %p66 = scmp.eq.s32.totalorder %s12, 1
      %p67 = por %p65, %p66
      %p68 = scmp.ne.s32.totalorder %s60, %s63
      %p69 = scmp.eq.s32.totalorder %s12, 0
      %p70 = por %p68, %p69
      %p71 = scmp.ne.s32.totalorder %s60, %s63
      %p72 = scmp.eq.s32.totalorder %s17, 1
      %p73 = por %p71, %p72
      %p74 = scmp.ne.s32.totalorder %s63, %s64
      %p75 = scmp.eq.s32.totalorder %s17, 0
      %p76 = por %p74, %p75
      %p77 = scmp.ne.s32.totalorder %s63, %s64
      %p78 = scmp.eq.s32.totalorder %s18, 1
      %p79 = por %p77, %p78
      %p81 = scmp.ne.s32.totalorder %s64, %s80
      %p82 = scmp.eq.s32.totalorder %s18, 0
      %p83 = por %p81, %p82
      %s85 = sadd.s32 %s84, 1
      %p88 = scmp.eq.s32.totalorder %s12, 1
      %p89 = scmp.ne.s32.totalorder %s84, %s86
      %p90 = scmp.eq.s32.totalorder %s12, 0
      %p91 = por %p89, %p90
      %p92 = scmp.ne.s32.totalorder %s84, %s86
      %p93 = scmp.eq.s32.totalorder %s17, 1
      %p94 = por %p92, %p93
      %p95 = scmp.ne.s32.totalorder %s86, %s87
      %p96 = scmp.eq.s32.totalorder %s17, 0
      %p97 = por %p95, %p96
      %p98 = scmp.ne.s32.totalorder %s86, %s87
      %p99 = scmp.eq.s32.totalorder %s18, 1
      %p100 = por %p98, %p99
      %p102 = scmp.ne.s32.totalorder %s87, %s101
      %p103 = scmp.eq.s32.totalorder %s18, 0
      %p104 = por %p102, %p103
      %s105 = ssub.s32 %s19, %s31
      %s106 = ssub.s32 %s20, %s27
      %s107 = sor.u32 %s105, %s106
      %p108 = scmp.eq.s32.totalorder %s107, 0
      %s110 = sadd.s32 %s109, 1
      %s111 = scalar_select %p108, %s109, %s110
      %p114 = pneg %p108
      %p115 = scmp.eq.s32.totalorder %s12, 1
      %p116 = por %p114, %p115
      %p117 = scmp.ne.s32.totalorder %s109, %s112
      %p118 = scmp.eq.s32.totalorder %s12, 0
      %p119 = por %p117, %p118
      %p120 = scmp.ne.s32.totalorder %s109, %s112
      %p121 = scmp.eq.s32.totalorder %s17, 1
      %p122 = por %p120, %p121
      %p123 = scmp.ne.s32.totalorder %s112, %s113
      %p124 = scmp.eq.s32.totalorder %s17, 0
      %p125 = por %p123, %p124
      %p126 = scmp.ne.s32.totalorder %s112, %s113
      %p127 = scmp.eq.s32.totalorder %s18, 1
      %p128 = por %p126, %p127
      %p130 = scmp.ne.s32.totalorder %s113, %s129
      %p131 = scmp.eq.s32.totalorder %s18, 0
      %p132 = por %p130, %p131
      %p133 = scmp.le.s32.totalorder 1, %s12
      %p134 = scmp.lt.s32.totalorder %s12, 3
      %p135 = pnand %p133, %p134
      %p136 = pneg %p135
      // Predicated region
      $region9: #{convolutional_block.1} parent=5 // pred_check
        _
      $region10: #{convolutional_block.1} parent=5 // pred_check_branch
        %138 = sbr.rel (%p135) target = $region12
      $region11: #{convolutional_block.1} parent=5 // pred_region
        %s139 = ssub.s32 %s12, 1
        // Predicated region
        $region13: #{convolutional_block.1} parent=11 // pred_check
          %p140 = pneg %p76
        $region14: #{convolutional_block.1} parent=11 // pred_check_branch
          %142 = sbr.rel (%p140) target = $region16
        $region15: #{convolutional_block.1} parent=11 // pred_region
          %p143 = scmp.lt.s32.totalorder %s22, 0
          %s144 = scalar_select %p143, %s22, 0
          %s145 = smul.addr %s144, 4
          %s146 = scalar_lea.vmem %s1, %s145
        $region16: #{convolutional_block.1} parent=11 // pred_fallthru
          _
        // Predicated region
        $region17: #{convolutional_block.1} parent=11 // pred_check
          %p147 = pneg %p97
        $region18: #{convolutional_block.1} parent=11 // pred_check_branch
          %149 = sbr.rel (%p147) target = $region20
        $region19: #{convolutional_block.1} parent=11 // pred_region
          _
        $region20: #{convolutional_block.1} parent=11 // pred_fallthru
          _
      $region12: #{convolutional_block.1} parent=5 // pred_fallthru
        _
      %p150 = scmp.lt.s32.totalorder %s12, 2
      // Predicated region
      $region21: #{convolutional_block.1} parent=5 // pred_check
        %p151 = pneg %p150
      $region22: #{convolutional_block.1} parent=5 // pred_check_branch
        %153 = sbr.rel (%p151) target = $region24
      $region23: #{convolutional_block.1} parent=5 // pred_region
        // Predicated region
        $region25: #{convolutional_block.1} parent=23 // pred_check
          %p154 = pneg %p44
        $region26: #{convolutional_block.1} parent=23 // pred_check_branch
          %156 = sbr.rel (%p154) target = $region28
        $region27: #{convolutional_block.1} parent=23 // pred_region
          %p157 = scmp.lt.s32.totalorder %s19, 1
          %s158 = scalar_select %p157, %s19, 1
          %s159 = smul.addr %s158, 3
          %s160 = smul.addr %s159, 4
          %s161 = scalar_lea.vmem %s0, %s160
        $region28: #{convolutional_block.1} parent=23 // pred_fallthru
          _
      $region24: #{convolutional_block.1} parent=5 // pred_fallthru
        _
      %p162 = scmp.le.s32.totalorder 1, %s12
      %p163 = scmp.lt.s32.totalorder %s12, 3
      %p164 = pnand %p162, %p163
      %p165 = pneg %p164
      // Predicated region
      $region29: #{convolutional_block.1} parent=5 // pred_check
        _
      $region30: #{convolutional_block.1} parent=5 // pred_check_branch
        %167 = sbr.rel (%p164) target = $region32
      $region31: #{convolutional_block.1} parent=5 // pred_region
        %s168 = ssub.s32 %s12, 1
        %p169 = scmp.lt.s32.totalorder %s21, 1
        %s170 = scalar_select %p169, %s21, 1
        %s171 = smul.addr %s170, 3
        %s172 = smul.addr %s171, 4
        %s173 = scalar_lea.vmem %s0, %s172
        %p174 = pneg %p50
        %p175 = pneg %p47
        %p176 = scmp.lt.s32.totalorder %s22, 0
        %s177 = scalar_select %p176, %s22, 0
        %s178 = smul.addr %s177, 4
        %s179 = scalar_lea.vmem %s1, %s178
        %p180 = pneg %p76
        %p181 = pneg %p73
        %p182 = pneg %p97
        %p183 = pneg %p94
        %p184 = pneg %p125
        %p185 = pneg %p122
        %s186 = sand.u32 %s112, 1
        %s187 = scalar_lea.sflag [#allocation3], %s186
        %s188 = sand.u32 %s112, 1
        %s189 = smul.addr %s188, 64
        %s190 = scalar_lea.vmem [#allocation2], %s189
        %p191 = scmp.lt.s32.totalorder %s21, 1
        %s192 = scalar_select %p191, %s21, 1
        %s193 = smul.addr %s192, 3
        %s194 = smul.addr %s193, 4
        %s195 = scalar_lea.vmem %s0, %s194
        %p196 = scmp.lt.s32.totalorder %s22, 0
        %s197 = scalar_select %p196, %s22, 0
        %s198 = smul.addr %s197, 4
        %s199 = scalar_lea.vmem %s1, %s198
        %s200 = smul.u32 4, %s22
        %v201 = vld [vmem:[%s195] sm:$0xff]
        %v202 = vld [vmem:[%s195 + $0x8] sm:$0xf]
        %v204 = vcombine.high %v201, %v201
        %206 = vrot.lane.b32.xlu0 %v201, 127
        %v207 = vpop.permute.xlu0 %206
        %208 = vrot.lane.b32.xlu0 %v204, 127
        %v209 = vpop.permute.xlu0 %208
        %210 = vrot.lane.b32.xlu0 %v202, 127
        %v211 = vpop.permute.xlu0 %210
        %v212 = vlaneseq
        %v213 = vand.u32 %v212, 127
        %vm214 = vcmp.lt.s32.totalorder %v213, 127
        %v215 = vsel %vm214, %v209, %v211
        %v216 = vsel %vm214, %v207, %v209
        %v217 = vsel %vm214, %v211, %v207
        %218 = vrot.lane.b32.xlu0 %v201, 126
        %v219 = vpop.permute.xlu0 %218
        %220 = vrot.lane.b32.xlu0 %v204, 126
        %v221 = vpop.permute.xlu0 %220
        %222 = vrot.lane.b32.xlu0 %v202, 126
        %v223 = vpop.permute.xlu0 %222
        %vm224 = vcmp.lt.s32.totalorder %v213, 126
        %v225 = vsel %vm224, %v221, %v223
        %v226 = vsel %vm224, %v219, %v221
        %v227 = vsel %vm224, %v223, %v219
        %228 = vrot.lane.b32.xlu0 %v201, 110
        %v229 = vpop.permute.xlu0 %228
        %230 = vrot.lane.b32.xlu0 %v204, 110
        %v231 = vpop.permute.xlu0 %230
        %232 = vrot.lane.b32.xlu0 %v202, 110
        %v233 = vpop.permute.xlu0 %232
        %vm234 = vcmp.lt.s32.totalorder %v213, 110
        %v235 = vsel %vm234, %v231, %v233
        %v236 = vsel %vm234, %v229, %v231
        %v237 = vsel %vm234, %v233, %v229
        %238 = vrot.lane.b32.xlu0 %v201, 109
        %v239 = vpop.permute.xlu0 %238
        %240 = vrot.lane.b32.xlu0 %v204, 109
        %v241 = vpop.permute.xlu0 %240
        %242 = vrot.lane.b32.xlu0 %v202, 109
        %v243 = vpop.permute.xlu0 %242
        %vm244 = vcmp.lt.s32.totalorder %v213, 109
        %v245 = vsel %vm244, %v241, %v243
        %v246 = vsel %vm244, %v239, %v241
        %v247 = vsel %vm244, %v243, %v239
        %248 = vrot.lane.b32.xlu0 %v201, 108
        %v249 = vpop.permute.xlu0 %248
        %250 = vrot.lane.b32.xlu0 %v204, 108
        %v251 = vpop.permute.xlu0 %250
        %252 = vrot.lane.b32.xlu0 %v202, 108
        %v253 = vpop.permute.xlu0 %252
        %vm254 = vcmp.lt.s32.totalorder %v213, 108
        %v255 = vsel %vm254, %v251, %v253
        %v256 = vsel %vm254, %v249, %v251
        %v257 = vsel %vm254, %v253, %v249
        %258 = vrot.lane.b32.xlu0 %v201, 92
        %v259 = vpop.permute.xlu0 %258
        %260 = vrot.lane.b32.xlu0 %v204, 92
        %v261 = vpop.permute.xlu0 %260
        %262 = vrot.lane.b32.xlu0 %v202, 92
        %v263 = vpop.permute.xlu0 %262
        %vm264 = vcmp.lt.s32.totalorder %v213, 92
        %v265 = vsel %vm264, %v261, %v263
        %v266 = vsel %vm264, %v259, %v261
        %v267 = vsel %vm264, %v263, %v259
        %268 = vrot.lane.b32.xlu0 %v201, 91
        %v269 = vpop.permute.xlu0 %268
        %270 = vrot.lane.b32.xlu0 %v204, 91
        %v271 = vpop.permute.xlu0 %270
        %272 = vrot.lane.b32.xlu0 %v202, 91
        %v273 = vpop.permute.xlu0 %272
        %vm274 = vcmp.lt.s32.totalorder %v213, 91
        %v275 = vsel %vm274, %v271, %v273
        %v276 = vsel %vm274, %v269, %v271
        %v277 = vsel %vm274, %v273, %v269
        %278 = vrot.lane.b32.xlu0 %v201, 90
        %v279 = vpop.permute.xlu0 %278
        %280 = vrot.lane.b32.xlu0 %v204, 90
        %v281 = vpop.permute.xlu0 %280
        %282 = vrot.lane.b32.xlu0 %v202, 90
        %v283 = vpop.permute.xlu0 %282
        %vm284 = vcmp.lt.s32.totalorder %v213, 90
        %v285 = vsel %vm284, %v281, %v283
        %v286 = vsel %vm284, %v279, %v281
        %v287 = vsel %vm284, %v283, %v279
        %v291 = vrot.slane %v216, 4
        %v292 = vrot.slane %v215, 4
        %v293 = vrot.slane %v217, 4
        %v300 = vrot.slane %v236, 4
        %v301 = vrot.slane %v235, 4
        %v302 = vrot.slane %v237, 4
        %v309 = vrot.slane %v256, 4
        %v310 = vrot.slane %v255, 4
        %v311 = vrot.slane %v257, 4
        %v318 = vrot.slane %v276, 4
        %v319 = vrot.slane %v275, 4
        %v320 = vrot.slane %v277, 4
        %vm324 = vcmask 1043456
        %v325 = vsel %vm324, %v201, %v291
        %v326 = vsel %vm324, %v204, %v292
        %v327 = vsel %vm324, %v202, %v293
        %v328 = vsel %vm324, %v226, %v300
        %v329 = vsel %vm324, %v225, %v301
        %v330 = vsel %vm324, %v227, %v302
        %v331 = vsel %vm324, %v246, %v309
        %v332 = vsel %vm324, %v245, %v310
        %v333 = vsel %vm324, %v247, %v311
        %v334 = vsel %vm324, %v266, %v318
        %v335 = vsel %vm324, %v265, %v319
        %v336 = vsel %vm324, %v267, %v320
        %v337 = vld [vmem:[%s199] sm:$0xf]
        %vm338 = vcmask 293888
        %v340 = vsel %vm338, %v337, 0
        %v343 = vsel %vm324, %v286, 0
        %v346 = vsel %vm324, %v285, 0
        %v349 = vsel %vm324, %v287, 0
        %351 = vmatprep.subr.mxu0 0.0
        %352 = vmatpush1.msra.mxu0 0.0
        %353 = vmatprep.subr.mxu0 0.0
        %354 = vmatpush1.msra.mxu0 0.0
        %355 = vmatprep.subr.mxu0 0.0
        %356 = vmatpush1.msra.mxu0 0.0
        %357 = vmatprep.subr.mxu0 0.0
        %358 = vmatpush1.msra.mxu0 0.0
        %359 = vmatprep.subr.mxu0 0.0
        %360 = vmatpush1.msra.mxu0 0.0
        %361 = vmatprep.subr.mxu0 0.0
        %362 = vmatpush1.msra.mxu0 0.0
        %363 = vmatprep.subr.mxu0 0.0
        %364 = vmatpush1.msra.mxu0 0.0
        %365 = vmatprep.subr.mxu0 0.0
        %366 = vmatpush1.msra.mxu0 0.0
        %367 = vmatprep.subr.mxu0 0.0
        %368 = vmatpush1.msra.mxu0 0.0
        %369 = vmatprep.subr.mxu0 0.0
        %370 = vmatpush1.msra.mxu0 0.0
        %371 = vmatprep.subr.mxu0 0.0
        %372 = vmatpush1.msra.mxu0 0.0
        %373 = vmatprep.subr.mxu0 %v346
        %374 = vmatpush1.msra.mxu0 %v343
        %375 = vmatprep.subr.mxu0 %v335
        %376 = vmatpush1.msra.mxu0 %v334
        %377 = vmatprep.subr.mxu0 %v332
        %378 = vmatpush1.msra.mxu0 %v331
        %379 = vmatprep.subr.mxu0 %v329
        %380 = vmatpush1.msra.mxu0 %v328
        %381 = vmatprep.subr.mxu0 %v326
        %382 = vmatpush1.msra.mxu0 %v325
        %383 = vmatprep.subr.mxu0 0.0
        %384 = vmatpush2.msra.mxu0 0.0
        %385 = vmatprep.subr.mxu0 0.0
        %386 = vmatpush2.msra.mxu0 0.0
        %387 = vmatprep.subr.mxu0 0.0
        %388 = vmatpush2.msra.mxu0 0.0
        %389 = vmatprep.subr.mxu0 0.0
        %390 = vmatpush2.msra.mxu0 0.0
        %391 = vmatprep.subr.mxu0 0.0
        %392 = vmatpush2.msra.mxu0 0.0
        %393 = vmatprep.subr.mxu0 0.0
        %394 = vmatpush2.msra.mxu0 0.0
        %395 = vmatprep.subr.mxu0 0.0
        %396 = vmatpush2.msra.mxu0 0.0
        %397 = vmatprep.subr.mxu0 0.0
        %398 = vmatpush2.msra.mxu0 0.0
        %399 = vmatprep.subr.mxu0 0.0
        %400 = vmatpush2.msra.mxu0 0.0
        %401 = vmatprep.subr.mxu0 0.0
        %402 = vmatpush2.msra.mxu0 0.0
        %403 = vmatprep.subr.mxu0 0.0
        %404 = vmatpush2.msra.mxu0 0.0
        %405 = vmatprep.subr.mxu0 0.0
        %406 = vmatpush2.msra.mxu0 0.0
        %407 = vmatprep.subr.mxu0 0.0
        %408 = vmatpush2.msra.mxu0 0.0
        %409 = vmatprep.subr.mxu0 0.0
        %410 = vmatpush2.msra.mxu0 0.0
        %411 = vmatprep.subr.mxu0 0.0
        %412 = vmatpush2.msra.mxu0 0.0
        %413 = vmatprep.subr.mxu0 0.0
        %414 = vmatpush2.msra.mxu0 0.0
        %415 = vmatprep.mubr.f32.mxu0 0.0
        %416 = vmatmul.mubr.f32.gmra.mxu0 %v340
        %v417 = vpop.f32.mrf.mxu0
        %v418 = vadd.f32 0.0, %v417
        %v419 = vpop.f32.mrf.mxu0
        %v420 = vadd.f32 0.0, %v419
        %421 = vdwg.mxu0
        %422 = vmatprep.subr.mxu0 0.0
        %423 = vmatpush1.msra.mxu0 0.0
        %424 = vmatprep.subr.mxu0 0.0
        %425 = vmatpush1.msra.mxu0 0.0
        %426 = vmatprep.subr.mxu0 0.0
        %427 = vmatpush1.msra.mxu0 0.0
        %428 = vmatprep.subr.mxu0 0.0
        %429 = vmatpush1.msra.mxu0 0.0
        %430 = vmatprep.subr.mxu0 0.0
        %431 = vmatpush1.msra.mxu0 0.0
        %432 = vmatprep.subr.mxu0 0.0
        %433 = vmatpush1.msra.mxu0 0.0
        %434 = vmatprep.subr.mxu0 0.0
        %435 = vmatpush1.msra.mxu0 0.0
        %436 = vmatprep.subr.mxu0 0.0
        %437 = vmatpush1.msra.mxu0 0.0
        %438 = vmatprep.subr.mxu0 0.0
        %439 = vmatpush1.msra.mxu0 0.0
        %440 = vmatprep.subr.mxu0 0.0
        %441 = vmatpush1.msra.mxu0 0.0
        %442 = vmatprep.subr.mxu0 0.0
        %443 = vmatpush1.msra.mxu0 0.0
        %444 = vmatprep.subr.mxu0 0.0
        %445 = vmatpush1.msra.mxu0 %v349
        %446 = vmatprep.subr.mxu0 0.0
        %447 = vmatpush1.msra.mxu0 %v336
        %448 = vmatprep.subr.mxu0 0.0
        %449 = vmatpush1.msra.mxu0 %v333
        %450 = vmatprep.subr.mxu0 0.0
        %451 = vmatpush1.msra.mxu0 %v330
        %452 = vmatprep.subr.mxu0 0.0
        %453 = vmatpush1.msra.mxu0 %v327
        %454 = vmatprep.subr.mxu0 0.0
        %455 = vmatpush2.msra.mxu0 0.0
        %456 = vmatprep.subr.mxu0 0.0
        %457 = vmatpush2.msra.mxu0 0.0
        %458 = vmatprep.subr.mxu0 0.0
        %459 = vmatpush2.msra.mxu0 0.0
        %460 = vmatprep.subr.mxu0 0.0
        %461 = vmatpush2.msra.mxu0 0.0
        %462 = vmatprep.subr.mxu0 0.0
        %463 = vmatpush2.msra.mxu0 0.0
        %464 = vmatprep.subr.mxu0 0.0
        %465 = vmatpush2.msra.mxu0 0.0
        %466 = vmatprep.subr.mxu0 0.0
        %467 = vmatpush2.msra.mxu0 0.0
        %468 = vmatprep.subr.mxu0 0.0
        %469 = vmatpush2.msra.mxu0 0.0
        %470 = vmatprep.subr.mxu0 0.0
        %471 = vmatpush2.msra.mxu0 0.0
        %472 = vmatprep.subr.mxu0 0.0
        %473 = vmatpush2.msra.mxu0 0.0
        %474 = vmatprep.subr.mxu0 0.0
        %475 = vmatpush2.msra.mxu0 0.0
        %476 = vmatprep.subr.mxu0 0.0
        %477 = vmatpush2.msra.mxu0 0.0
        %478 = vmatprep.subr.mxu0 0.0
        %479 = vmatpush2.msra.mxu0 0.0
        %480 = vmatprep.subr.mxu0 0.0
        %481 = vmatpush2.msra.mxu0 0.0
        %482 = vmatprep.subr.mxu0 0.0
        %483 = vmatpush2.msra.mxu0 0.0
        %484 = vmatprep.subr.mxu0 0.0
        %485 = vmatpush2.msra.mxu0 0.0
        %486 = vmatprep.mubr.f32.mxu0 0.0
        %487 = vmatmul.mubr.f32.gmra.mxu0 %v340
        %v488 = vpop.f32.mrf.mxu0
        %v489 = vadd.f32 0.0, %v488
        %v490 = vpop.f32.mrf.mxu0
        %491 = vdwg.mxu0
        %v492 = vld [vmem:[%s2] sm:$0x7]
        %v494 = vlaneseq
        %v495 = vshrl.u32 %v494, 7
        %v496 = vsub.s32 0, %v495
        %v497 = vrot.slane %v492, %v496
        %v498 = vlaneseq
        %v499 = vshrl.u32 %v498, 7
        %v500 = vsub.s32 1, %v499
        %v501 = vrot.slane %v492, %v500
        %v502 = vlaneseq
        %v503 = vshrl.u32 %v502, 7
        %v504 = vsub.s32 2, %v503
        %v505 = vrot.slane %v492, %v504
        %v509 = vmul.f32 %v418, %v497
        %v510 = vmul.f32 %v420, %v501
        %v511 = vmul.f32 %v489, %v505
        %v512 = vsel %vm324, %v509, 0.0
        %v513 = vsel %vm324, %v510, 0.0
        %v514 = vadd.f32 %v512, %v513
        %v515 = vsel %vm324, %v511, 0.0
        %v516 = vadd.f32 %v514, %v515
        %517 = vadd.xlane.f32.xlu0 %v516
        %v518 = vpop.xlane.xlu0 %517
        %v519 = vmul.f32 %v518, 0.00390625
        %v520 = vmul.f32 %v509, %v509
        %v521 = vmul.f32 %v510, %v510
        %v522 = vmul.f32 %v511, %v511
        %v523 = vsel %vm324, %v520, 0.0
        %v524 = vsel %vm324, %v521, 0.0
        %v525 = vadd.f32 %v523, %v524
        %v526 = vsel %vm324, %v522, 0.0
        %v527 = vadd.f32 %v525, %v526
        %528 = vadd.xlane.f32.xlu0 %v527
        %v529 = vpop.xlane.xlu0 %528
        %v530 = vmul.f32 %v529, 0.00390625
        %v531 = vmul.f32 %v519, %v519
        %v532 = vsub.f32 %v530, %v531
        %v533 = vmax.f32 %v532, 0.0
        %v534 = vsub.f32 %v509, %v519
        %v535 = vsub.f32 %v510, %v519
        %v536 = vsub.f32 %v511, %v519
        %v537 = vadd.f32 %v533, 1e-05
        %v538 = vrsqrt.pop %v537
        %v539 = vmul.f32 %v534, %v538
        %v540 = vmul.f32 %v535, %v538
        %v541 = vmul.f32 %v536, %v538
        %v542 = vmax.f32 %v539, 0.0
        %v543 = vmax.f32 %v540, 0.0
        %v544 = vmax.f32 %v541, 0.0
        %v547 = vunpack.c.l.s4 1966171168
        %v548 = vunpack.c.0.s8 %v547
        %v549 = vlaneseq
        %v550 = vshrl.u32 %v549, 7
        %v551 = vsub.s32 %v548, %v550
        %v552 = vrot.slane %v542, %v551
        %v553 = vcombine.high %v552, %v552
        %v555 = vunpack.c.l.s4 1966171168
        %v556 = vunpack.c.0.s8 %v555
        %v557 = vlaneseq
        %v558 = vshrl.u32 %v557, 7
        %v559 = vsub.s32 %v556, %v558
        %v560 = vrot.slane %v552, %v559
        %v562 = vunpack.c.l.s4 1966171168
        %v563 = vunpack.c.0.s8 %v562
        %v564 = vlaneseq
        %v565 = vshrl.u32 %v564, 7
        %v566 = vsub.s32 %v563, %v565
        %v567 = vrot.slane %v553, %v566
        %v568 = vcombine.high %v560, %v560
        %v569 = vcombine.high %v567, %v567
        %vm574 = vcmask 122880
        %575 = vst.msk [vmem:[%s190] sm:$0x1] %vm574, %v560
        %576 = vst.msk [vmem:[%s190 + $0x10] sm:$0x1] %vm574, %v567
        %577 = vst.msk [vmem:[%s190 + $0x20] sm:$0x1] %vm574, %v568
        %578 = vst.msk [vmem:[%s190 + $0x30] sm:$0x1] %vm574, %v569
        %v579 = vlaneseq
        %v580 = vshrl.u32 %v579, 7
        %v581 = vsub.s32 0, %v580
        %v582 = vrot.slane %v560, %v581
        %v583 = vlaneseq
        %v584 = vshrl.u32 %v583, 7
        %v585 = vsub.s32 0, %v584
        %v586 = vrot.slane %v567, %v585
        %v587 = vlaneseq
        %v588 = vshrl.u32 %v587, 7
        %v589 = vsub.s32 0, %v588
        %v590 = vrot.slane %v568, %v589
        %v591 = vlaneseq
        %v592 = vshrl.u32 %v591, 7
        %v593 = vsub.s32 0, %v592
        %v594 = vrot.slane %v569, %v593
        %595 = vrot.lane.b32.xlu0 %v582, 110
        %v596 = vpop.permute.xlu0 %595
        %597 = vrot.lane.b32.xlu0 %v586, 110
        %v598 = vpop.permute.xlu0 %597
        %599 = vrot.lane.b32.xlu0 %v590, 110
        %v600 = vpop.permute.xlu0 %599
        %601 = vrot.lane.b32.xlu0 %v594, 110
        %v602 = vpop.permute.xlu0 %601
        %607 = vst.msk [vmem:[%s190 + $0x1] sm:$0x1] %vm574, %v596
        %608 = vst.msk [vmem:[%s190 + $0x11] sm:$0x1] %vm574, %v598
        %609 = vst.msk [vmem:[%s190 + $0x21] sm:$0x1] %vm574, %v600
        %610 = vst.msk [vmem:[%s190 + $0x31] sm:$0x1] %vm574, %v602
        %611 = vrot.lane.b32.xlu0 %v582, 92
        %v612 = vpop.permute.xlu0 %611
        %613 = vrot.lane.b32.xlu0 %v586, 92
        %v614 = vpop.permute.xlu0 %613
        %615 = vrot.lane.b32.xlu0 %v590, 92
        %v616 = vpop.permute.xlu0 %615
        %617 = vrot.lane.b32.xlu0 %v594, 92
        %v618 = vpop.permute.xlu0 %617
        %623 = vst.msk [vmem:[%s190 + $0x2] sm:$0x1] %vm574, %v612
        %624 = vst.msk [vmem:[%s190 + $0x12] sm:$0x1] %vm574, %v614
        %625 = vst.msk [vmem:[%s190 + $0x22] sm:$0x1] %vm574, %v616
        %626 = vst.msk [vmem:[%s190 + $0x32] sm:$0x1] %vm574, %v618
        %627 = vrot.lane.b32.xlu0 %v582, 74
        %v628 = vpop.permute.xlu0 %627
        %629 = vrot.lane.b32.xlu0 %v586, 74
        %v630 = vpop.permute.xlu0 %629
        %631 = vrot.lane.b32.xlu0 %v590, 74
        %v632 = vpop.permute.xlu0 %631
        %633 = vrot.lane.b32.xlu0 %v594, 74
        %v634 = vpop.permute.xlu0 %633
        %639 = vst.msk [vmem:[%s190 + $0x3] sm:$0x1] %vm574, %v628
        %640 = vst.msk [vmem:[%s190 + $0x13] sm:$0x1] %vm574, %v630
        %641 = vst.msk [vmem:[%s190 + $0x23] sm:$0x1] %vm574, %v632
        %642 = vst.msk [vmem:[%s190 + $0x33] sm:$0x1] %vm574, %v634
        %643 = vrot.lane.b32.xlu0 %v582, 56
        %v644 = vpop.permute.xlu0 %643
        %645 = vrot.lane.b32.xlu0 %v586, 56
        %v646 = vpop.permute.xlu0 %645
        %647 = vrot.lane.b32.xlu0 %v590, 56
        %v648 = vpop.permute.xlu0 %647
        %649 = vrot.lane.b32.xlu0 %v594, 56
        %v650 = vpop.permute.xlu0 %649
        %655 = vst.msk [vmem:[%s190 + $0x4] sm:$0x1] %vm574, %v644
        %656 = vst.msk [vmem:[%s190 + $0x14] sm:$0x1] %vm574, %v646
        %657 = vst.msk [vmem:[%s190 + $0x24] sm:$0x1] %vm574, %v648
        %658 = vst.msk [vmem:[%s190 + $0x34] sm:$0x1] %vm574, %v650
        %659 = vrot.lane.b32.xlu0 %v582, 38
        %v660 = vpop.permute.xlu0 %659
        %661 = vrot.lane.b32.xlu0 %v586, 38
        %v662 = vpop.permute.xlu0 %661
        %663 = vrot.lane.b32.xlu0 %v590, 38
        %v664 = vpop.permute.xlu0 %663
        %665 = vrot.lane.b32.xlu0 %v594, 38
        %v666 = vpop.permute.xlu0 %665
        %671 = vst.msk [vmem:[%s190 + $0x5] sm:$0x1] %vm574, %v660
        %672 = vst.msk [vmem:[%s190 + $0x15] sm:$0x1] %vm574, %v662
        %673 = vst.msk [vmem:[%s190 + $0x25] sm:$0x1] %vm574, %v664
        %674 = vst.msk [vmem:[%s190 + $0x35] sm:$0x1] %vm574, %v666
        %675 = vrot.lane.b32.xlu0 %v582, 20
        %v676 = vpop.permute.xlu0 %675
        %677 = vrot.lane.b32.xlu0 %v586, 20
        %v678 = vpop.permute.xlu0 %677
        %679 = vrot.lane.b32.xlu0 %v590, 20
        %v680 = vpop.permute.xlu0 %679
        %681 = vrot.lane.b32.xlu0 %v594, 20
        %v682 = vpop.permute.xlu0 %681
        %687 = vst.msk [vmem:[%s190 + $0x6] sm:$0x1] %vm574, %v676
        %688 = vst.msk [vmem:[%s190 + $0x16] sm:$0x1] %vm574, %v678
        %689 = vst.msk [vmem:[%s190 + $0x26] sm:$0x1] %vm574, %v680
        %690 = vst.msk [vmem:[%s190 + $0x36] sm:$0x1] %vm574, %v682
        %v692 = vcombine.low %v542, %v543
        %v694 = vunpack.c.l.s4 1966171168
        %v695 = vunpack.c.0.s8 %v694
        %v696 = vlaneseq
        %v697 = vshrl.u32 %v696, 7
        %v698 = vsub.s32 %v695, %v697
        %v699 = vrot.slane %v692, %v698
        %v700 = vcombine.high %v699, %v699
        %v702 = vunpack.c.l.s4 1966171168
        %v703 = vunpack.c.0.s8 %v702
        %v704 = vlaneseq
        %v705 = vshrl.u32 %v704, 7
        %v706 = vsub.s32 %v703, %v705
        %v707 = vrot.slane %v699, %v706
        %v709 = vunpack.c.l.s4 1966171168
        %v710 = vunpack.c.0.s8 %v709
        %v711 = vlaneseq
        %v712 = vshrl.u32 %v711, 7
        %v713 = vsub.s32 %v710, %v712
        %v714 = vrot.slane %v700, %v713
        %v715 = vcombine.high %v707, %v707
        %v716 = vcombine.high %v714, %v714
        %v717 = vlaneseq
        %v718 = vshrl.u32 %v717, 7
        %v719 = vsub.s32 0, %v718
        %v720 = vrot.slane %v707, %v719
        %v721 = vlaneseq
        %v722 = vshrl.u32 %v721, 7
        %v723 = vsub.s32 1, %v722
        %v724 = vrot.slane %v707, %v723
        %v725 = vlaneseq
        %v726 = vshrl.u32 %v725, 7
        %v727 = vsub.s32 0, %v726
        %v728 = vrot.slane %v714, %v727
        %v729 = vlaneseq
        %v730 = vshrl.u32 %v729, 7
        %v731 = vsub.s32 1, %v730
        %v732 = vrot.slane %v714, %v731
        %v733 = vlaneseq
        %v734 = vshrl.u32 %v733, 7
        %v735 = vsub.s32 0, %v734
        %v736 = vrot.slane %v715, %v735
        %v737 = vlaneseq
        %v738 = vshrl.u32 %v737, 7
        %v739 = vsub.s32 1, %v738
        %v740 = vrot.slane %v715, %v739
        %v741 = vlaneseq
        %v742 = vshrl.u32 %v741, 7
        %v743 = vsub.s32 0, %v742
        %v744 = vrot.slane %v716, %v743
        %v745 = vlaneseq
        %v746 = vshrl.u32 %v745, 7
        %v747 = vsub.s32 1, %v746
        %v748 = vrot.slane %v716, %v747
        %749 = vrot.lane.b32.xlu0 %v720, 2
        %v750 = vpop.permute.xlu0 %749
        %751 = vrot.lane.b32.xlu0 %v724, 2
        %v752 = vpop.permute.xlu0 %751
        %753 = vrot.lane.b32.xlu0 %v728, 2
        %v754 = vpop.permute.xlu0 %753
        %755 = vrot.lane.b32.xlu0 %v732, 2
        %v756 = vpop.permute.xlu0 %755
        %757 = vrot.lane.b32.xlu0 %v736, 2
        %v758 = vpop.permute.xlu0 %757
        %759 = vrot.lane.b32.xlu0 %v740, 2
        %v760 = vpop.permute.xlu0 %759
        %761 = vrot.lane.b32.xlu0 %v744, 2
        %v762 = vpop.permute.xlu0 %761
        %763 = vrot.lane.b32.xlu0 %v748, 2
        %v764 = vpop.permute.xlu0 %763
        %vm765 = vcmask 15360
        %v766 = vsel %vm765, %v750, %v752
        %v767 = vsel %vm765, %v754, %v756
        %v768 = vsel %vm765, %v758, %v760
        %v769 = vsel %vm765, %v762, %v764
        %774 = vst.msk [vmem:[%s190 + $0x7] sm:$0x1] %vm574, %v766
        %775 = vst.msk [vmem:[%s190 + $0x17] sm:$0x1] %vm574, %v767
        %776 = vst.msk [vmem:[%s190 + $0x27] sm:$0x1] %vm574, %v768
        %777 = vst.msk [vmem:[%s190 + $0x37] sm:$0x1] %vm574, %v769
        %v779 = vunpack.c.l.s4 1966171168
        %v780 = vunpack.c.0.s8 %v779
        %v781 = vlaneseq
        %v782 = vshrl.u32 %v781, 7
        %v783 = vsub.s32 %v780, %v782
        %v784 = vrot.slane %v543, %v783
        %v785 = vcombine.high %v784, %v784
        %v787 = vunpack.c.l.s4 1966171168
        %v788 = vunpack.c.0.s8 %v787
        %v789 = vlaneseq
        %v790 = vshrl.u32 %v789, 7
        %v791 = vsub.s32 %v788, %v790
        %v792 = vrot.slane %v784, %v791
        %v794 = vunpack.c.l.s4 1966171168
        %v795 = vunpack.c.0.s8 %v794
        %v796 = vlaneseq
        %v797 = vshrl.u32 %v796, 7
        %v798 = vsub.s32 %v795, %v797
        %v799 = vrot.slane %v785, %v798
        %v800 = vcombine.high %v792, %v792
        %v801 = vcombine.high %v799, %v799
        %v802 = vlaneseq
        %v803 = vshrl.u32 %v802, 7
        %v804 = vsub.s32 0, %v803
        %v805 = vrot.slane %v792, %v804
        %v806 = vlaneseq
        %v807 = vshrl.u32 %v806, 7
        %v808 = vsub.s32 0, %v807
        %v809 = vrot.slane %v799, %v808
        %v810 = vlaneseq
        %v811 = vshrl.u32 %v810, 7
        %v812 = vsub.s32 0, %v811
        %v813 = vrot.slane %v800, %v812
        %v814 = vlaneseq
        %v815 = vshrl.u32 %v814, 7
        %v816 = vsub.s32 0, %v815
        %v817 = vrot.slane %v801, %v816
        %818 = vrot.lane.b32.xlu0 %v805, 112
        %v819 = vpop.permute.xlu0 %818
        %820 = vrot.lane.b32.xlu0 %v809, 112
        %v821 = vpop.permute.xlu0 %820
        %822 = vrot.lane.b32.xlu0 %v813, 112
        %v823 = vpop.permute.xlu0 %822
        %824 = vrot.lane.b32.xlu0 %v817, 112
        %v825 = vpop.permute.xlu0 %824
        %830 = vst.msk [vmem:[%s190 + $0x8] sm:$0x1] %vm574, %v819
        %831 = vst.msk [vmem:[%s190 + $0x18] sm:$0x1] %vm574, %v821
        %832 = vst.msk [vmem:[%s190 + $0x28] sm:$0x1] %vm574, %v823
        %833 = vst.msk [vmem:[%s190 + $0x38] sm:$0x1] %vm574, %v825
        %834 = vrot.lane.b32.xlu0 %v805, 94
        %v835 = vpop.permute.xlu0 %834
        %836 = vrot.lane.b32.xlu0 %v809, 94
        %v837 = vpop.permute.xlu0 %836
        %838 = vrot.lane.b32.xlu0 %v813, 94
        %v839 = vpop.permute.xlu0 %838
        %840 = vrot.lane.b32.xlu0 %v817, 94
        %v841 = vpop.permute.xlu0 %840
        %846 = vst.msk [vmem:[%s190 + $0x9] sm:$0x1] %vm574, %v835
        %847 = vst.msk [vmem:[%s190 + $0x19] sm:$0x1] %vm574, %v837
        %848 = vst.msk [vmem:[%s190 + $0x29] sm:$0x1] %vm574, %v839
        %849 = vst.msk [vmem:[%s190 + $0x39] sm:$0x1] %vm574, %v841
        %850 = vrot.lane.b32.xlu0 %v805, 76
        %v851 = vpop.permute.xlu0 %850
        %852 = vrot.lane.b32.xlu0 %v809, 76
        %v853 = vpop.permute.xlu0 %852
        %854 = vrot.lane.b32.xlu0 %v813, 76
        %v855 = vpop.permute.xlu0 %854
        %856 = vrot.lane.b32.xlu0 %v817, 76
        %v857 = vpop.permute.xlu0 %856
        %862 = vst.msk [vmem:[%s190 + $0xa] sm:$0x1] %vm574, %v851
        %863 = vst.msk [vmem:[%s190 + $0x1a] sm:$0x1] %vm574, %v853
        %864 = vst.msk [vmem:[%s190 + $0x2a] sm:$0x1] %vm574, %v855
        %865 = vst.msk [vmem:[%s190 + $0x3a] sm:$0x1] %vm574, %v857
        %866 = vrot.lane.b32.xlu0 %v805, 58
        %v867 = vpop.permute.xlu0 %866
        %868 = vrot.lane.b32.xlu0 %v809, 58
        %v869 = vpop.permute.xlu0 %868
        %870 = vrot.lane.b32.xlu0 %v813, 58
        %v871 = vpop.permute.xlu0 %870
        %872 = vrot.lane.b32.xlu0 %v817, 58
        %v873 = vpop.permute.xlu0 %872
        %878 = vst.msk [vmem:[%s190 + $0xb] sm:$0x1] %vm574, %v867
        %879 = vst.msk [vmem:[%s190 + $0x1b] sm:$0x1] %vm574, %v869
        %880 = vst.msk [vmem:[%s190 + $0x2b] sm:$0x1] %vm574, %v871
        %881 = vst.msk [vmem:[%s190 + $0x3b] sm:$0x1] %vm574, %v873
        %882 = vrot.lane.b32.xlu0 %v805, 40
        %v883 = vpop.permute.xlu0 %882
        %884 = vrot.lane.b32.xlu0 %v809, 40
        %v885 = vpop.permute.xlu0 %884
        %886 = vrot.lane.b32.xlu0 %v813, 40
        %v887 = vpop.permute.xlu0 %886
        %888 = vrot.lane.b32.xlu0 %v817, 40
        %v889 = vpop.permute.xlu0 %888
        %894 = vst.msk [vmem:[%s190 + $0xc] sm:$0x1] %vm574, %v883
        %895 = vst.msk [vmem:[%s190 + $0x1c] sm:$0x1] %vm574, %v885
        %896 = vst.msk [vmem:[%s190 + $0x2c] sm:$0x1] %vm574, %v887
        %897 = vst.msk [vmem:[%s190 + $0x3c] sm:$0x1] %vm574, %v889
        %898 = vrot.lane.b32.xlu0 %v805, 22
        %v899 = vpop.permute.xlu0 %898
        %900 = vrot.lane.b32.xlu0 %v809, 22
        %v901 = vpop.permute.xlu0 %900
        %902 = vrot.lane.b32.xlu0 %v813, 22
        %v903 = vpop.permute.xlu0 %902
        %904 = vrot.lane.b32.xlu0 %v817, 22
        %v905 = vpop.permute.xlu0 %904
        %910 = vst.msk [vmem:[%s190 + $0xd] sm:$0x1] %vm574, %v899
        %911 = vst.msk [vmem:[%s190 + $0x1d] sm:$0x1] %vm574, %v901
        %912 = vst.msk [vmem:[%s190 + $0x2d] sm:$0x1] %vm574, %v903
        %913 = vst.msk [vmem:[%s190 + $0x3d] sm:$0x1] %vm574, %v905
        %v915 = vcombine.low %v543, %v544
        %v917 = vunpack.c.l.s4 1966171168
        %v918 = vunpack.c.0.s8 %v917
        %v919 = vlaneseq
        %v920 = vshrl.u32 %v919, 7
        %v921 = vsub.s32 %v918, %v920
        %v922 = vrot.slane %v915, %v921
        %v923 = vcombine.high %v922, %v922
        %v925 = vunpack.c.l.s4 1966171168
        %v926 = vunpack.c.0.s8 %v925
        %v927 = vlaneseq
        %v928 = vshrl.u32 %v927, 7
        %v929 = vsub.s32 %v926, %v928
        %v930 = vrot.slane %v922, %v929
        %v932 = vunpack.c.l.s4 1966171168
        %v933 = vunpack.c.0.s8 %v932
        %v934 = vlaneseq
        %v935 = vshrl.u32 %v934, 7
        %v936 = vsub.s32 %v933, %v935
        %v937 = vrot.slane %v923, %v936
        %v938 = vcombine.high %v930, %v930
        %v939 = vcombine.high %v937, %v937
        %v940 = vlaneseq
        %v941 = vshrl.u32 %v940, 7
        %v942 = vsub.s32 0, %v941
        %v943 = vrot.slane %v930, %v942
        %v944 = vlaneseq
        %v945 = vshrl.u32 %v944, 7
        %v946 = vsub.s32 1, %v945
        %v947 = vrot.slane %v930, %v946
        %v948 = vlaneseq
        %v949 = vshrl.u32 %v948, 7
        %v950 = vsub.s32 0, %v949
        %v951 = vrot.slane %v937, %v950
        %v952 = vlaneseq
        %v953 = vshrl.u32 %v952, 7
        %v954 = vsub.s32 1, %v953
        %v955 = vrot.slane %v937, %v954
        %v956 = vlaneseq
        %v957 = vshrl.u32 %v956, 7
        %v958 = vsub.s32 0, %v957
        %v959 = vrot.slane %v938, %v958
        %v960 = vlaneseq
        %v961 = vshrl.u32 %v960, 7
        %v962 = vsub.s32 1, %v961
        %v963 = vrot.slane %v938, %v962
        %v964 = vlaneseq
        %v965 = vshrl.u32 %v964, 7
        %v966 = vsub.s32 0, %v965
        %v967 = vrot.slane %v939, %v966
        %v968 = vlaneseq
        %v969 = vshrl.u32 %v968, 7
        %v970 = vsub.s32 1, %v969
        %v971 = vrot.slane %v939, %v970
        %972 = vrot.lane.b32.xlu0 %v943, 4
        %v973 = vpop.permute.xlu0 %972
        %974 = vrot.lane.b32.xlu0 %v947, 4
        %v975 = vpop.permute.xlu0 %974
        %976 = vrot.lane.b32.xlu0 %v951, 4
        %v977 = vpop.permute.xlu0 %976
        %978 = vrot.lane.b32.xlu0 %v955, 4
        %v979 = vpop.permute.xlu0 %978
        %980 = vrot.lane.b32.xlu0 %v959, 4
        %v981 = vpop.permute.xlu0 %980
        %982 = vrot.lane.b32.xlu0 %v963, 4
        %v983 = vpop.permute.xlu0 %982
        %984 = vrot.lane.b32.xlu0 %v967, 4
        %v985 = vpop.permute.xlu0 %984
        %986 = vrot.lane.b32.xlu0 %v971, 4
        %v987 = vpop.permute.xlu0 %986
        %vm988 = vcmask 31744
        %v989 = vsel %vm988, %v973, %v975
        %v990 = vsel %vm988, %v977, %v979
        %v991 = vsel %vm988, %v981, %v983
        %v992 = vsel %vm988, %v985, %v987
        %997 = vst.msk [vmem:[%s190 + $0xe] sm:$0x1] %vm574, %v989
        %998 = vst.msk [vmem:[%s190 + $0x1e] sm:$0x1] %vm574, %v990
        %999 = vst.msk [vmem:[%s190 + $0x2e] sm:$0x1] %vm574, %v991
        %1000 = vst.msk [vmem:[%s190 + $0x3e] sm:$0x1] %vm574, %v992
        %v1002 = vunpack.c.l.s4 1966171168
        %v1003 = vunpack.c.0.s8 %v1002
        %v1004 = vlaneseq
        %v1005 = vshrl.u32 %v1004, 7
        %v1006 = vsub.s32 %v1003, %v1005
        %v1007 = vrot.slane %v544, %v1006
        %v1008 = vcombine.high %v1007, %v1007
        %v1010 = vunpack.c.l.s4 1966171168
        %v1011 = vunpack.c.0.s8 %v1010
        %v1012 = vlaneseq
        %v1013 = vshrl.u32 %v1012, 7
        %v1014 = vsub.s32 %v1011, %v1013
        %v1015 = vrot.slane %v1007, %v1014
        %v1017 = vunpack.c.l.s4 1966171168
        %v1018 = vunpack.c.0.s8 %v1017
        %v1019 = vlaneseq
        %v1020 = vshrl.u32 %v1019, 7
        %v1021 = vsub.s32 %v1018, %v1020
        %v1022 = vrot.slane %v1008, %v1021
        %v1023 = vcombine.high %v1015, %v1015
        %v1024 = vcombine.high %v1022, %v1022
        %v1025 = vlaneseq
        %v1026 = vshrl.u32 %v1025, 7
        %v1027 = vsub.s32 0, %v1026
        %v1028 = vrot.slane %v1015, %v1027
        %v1029 = vlaneseq
        %v1030 = vshrl.u32 %v1029, 7
        %v1031 = vsub.s32 0, %v1030
        %v1032 = vrot.slane %v1022, %v1031
        %v1033 = vlaneseq
        %v1034 = vshrl.u32 %v1033, 7
        %v1035 = vsub.s32 0, %v1034
        %v1036 = vrot.slane %v1023, %v1035
        %v1037 = vlaneseq
        %v1038 = vshrl.u32 %v1037, 7
        %v1039 = vsub.s32 0, %v1038
        %v1040 = vrot.slane %v1024, %v1039
        %1041 = vrot.lane.b32.xlu0 %v1028, 114
        %v1042 = vpop.permute.xlu0 %1041
        %1043 = vrot.lane.b32.xlu0 %v1032, 114
        %v1044 = vpop.permute.xlu0 %1043
        %1045 = vrot.lane.b32.xlu0 %v1036, 114
        %v1046 = vpop.permute.xlu0 %1045
        %1047 = vrot.lane.b32.xlu0 %v1040, 114
        %v1048 = vpop.permute.xlu0 %1047
        %1053 = vst.msk [vmem:[%s190 + $0xf] sm:$0x1] %vm574, %v1042
        %1054 = vst.msk [vmem:[%s190 + $0x1f] sm:$0x1] %vm574, %v1044
        %1055 = vst.msk [vmem:[%s190 + $0x2f] sm:$0x1] %vm574, %v1046
        %1056 = vst.msk [vmem:[%s190 + $0x3f] sm:$0x1] %vm574, %v1048
        %s1057 = sand.u32 %s112, 1
        %s1058 = scalar_lea.sflag [#allocation3], %s1057
        %s1059 = sand.u32 %s112, 1
        %s1060 = smul.addr %s1059, 64
        %s1061 = scalar_lea.vmem [#allocation2], %s1060
        // Predicated region
        $region33: #{convolutional_block.1} parent=31 // pred_check
          %p1062 = pneg %p122
        $region34: #{convolutional_block.1} parent=31 // pred_check_branch
          %1064 = sbr.rel (%p1062) target = $region36
        $region35: #{convolutional_block.1} parent=31 // pred_region
          %s1065 = smul.u32 4, %s22
          %s1067 = ssub.s32 1024, 1024
          %1068 = vsyncadd %s1058, %s1067
          %s1069 = smul.addr %s1065, 2
          %s1070 = smul.addr %s21, 8
          %s1071 = sadd.s32 %s1069, %s1070
          %s1072 = smul.addr %s1071, 128
          %s1073 = scalar_lea.hbm %s3, %s1072
          %s1074 = sshll.u32 %s1061, 4
          %s1075 = int_to_ptr.vmem [resolvable:$true] %s1074
          %1080 = dma.vmem_to_hbm [thread:$0]  %s1075, 1024, %s1073, %s1058, 128, 128, 8
        $region36: #{convolutional_block.1} parent=31 // pred_fallthru
          _
      $region32: #{convolutional_block.1} parent=5 // pred_fallthru
        _
      %p1081 = scmp.le.s32.totalorder 2, %s12
      // Predicated region
      $region37: #{convolutional_block.1} parent=5 // pred_check
        %p1082 = pneg %p1081
      $region38: #{convolutional_block.1} parent=5 // pred_check_branch
        %1084 = sbr.rel (%p1082) target = $region40
      $region39: #{convolutional_block.1} parent=5 // pred_region
        %s1085 = ssub.s32 %s12, 2
        // Predicated region
        $region41: #{convolutional_block.1} parent=39 // pred_check
          %p1086 = pneg %p128
        $region42: #{convolutional_block.1} parent=39 // pred_check_branch
          %1088 = sbr.rel (%p1086) target = $region44
        $region43: #{convolutional_block.1} parent=39 // pred_region
          %s1089 = sand.u32 %s113, 1
          %s1090 = scalar_lea.sflag [#allocation3], %s1089
          %s1091 = sand.u32 %s113, 1
          %s1092 = smul.addr %s1091, 64
          %s1093 = scalar_lea.vmem [#allocation2], %s1092
          %1094 = dma.done %s1090, 1024
        $region44: #{convolutional_block.1} parent=39 // pred_fallthru
          _
      $region40: #{convolutional_block.1} parent=5 // pred_fallthru
        _
    $region6: #{convolutional_block.1} parent=1 // loop_footer
      %s16 = sadd.s32 1, %s12
    $region7: #{convolutional_block.1} parent=1 // loop_footer_branch
      %11 = sbr.rel target = $region3
    $region8: #{convolutional_block.1} parent=1 // loop_exit
      _
    %1095 = vsyncpa [#allocation3], 1
    %s1096 = scalar_lea.sflag [#allocation3], 1
    %1097 = vsyncpa %s1096, 1

</llo_original>
